<compile_context>
chip_gen: v6e
topology: v6e:2x2x1
jax: 0.10.0
libtpu: 0.0.40
codegen_flags: <defaults>
</compile_context>

<pallas_src>
import jax
import jax.numpy as jnp
from jax.experimental import pallas as pl
from jax.experimental.pallas import tpu as pltpu


def _scalar_kernel(c_ref, o_ref):
    # Pure passthrough: Scalar.forward() just returns the parameter.
    o_ref[...] = c_ref[...]


def scalar_forward(constant):
    """Pallas forward for `Scalar`: returns the learnable constant.

    `constant` is a 0-d (or size-1) float32 parameter. TPU vector memory wants
    >= 2-D operands, so the value is staged through a (1, 1) VMEM tile and
    reshaped back to a 0-d scalar on the way out. No grid is used: the kernel
    body runs exactly once on the whole (tiny) array, which avoids all
    pipeline/loop overhead.
    """
    c2d = jnp.asarray(constant, jnp.float32).reshape(1, 1)
    out = pl.pallas_call(
        _scalar_kernel,
        out_shape=jax.ShapeDtypeStruct((1, 1), jnp.float32),
        in_specs=[pl.BlockSpec(memory_space=pltpu.MemorySpace.VMEM)],
        out_specs=pl.BlockSpec(memory_space=pltpu.MemorySpace.VMEM),
    )(c2d)
    return out.reshape(())


def init_params(init_value):
    """Matches Scalar.__init__: a single learnable float32 scalar."""
    return {"constant": jnp.asarray(init_value, dtype=jnp.float32)}


if __name__ == "__main__":
    # Deterministic "input": the module has no forward inputs, only the scalar
    # parameter. Use PRNGKey(0) to pick a deterministic, non-trivial init value
    # and also exercise a fixed init (the typical SAC log_alpha init of 0.0).
    key = jax.random.PRNGKey(0)
    rand_init = jax.random.normal(key, (), dtype=jnp.float32)

    params = init_params(rand_init)
    fwd = jax.jit(scalar_forward)
    out = fwd(params["constant"])
    jax.block_until_ready(out)

    assert out.shape == ()
    assert out.dtype == jnp.float32
    assert jnp.allclose(out, params["constant"], atol=0.0, rtol=0.0)

    # Second head of the test: fixed init value, un-jitted path.
    params0 = init_params(0.0)
    out0 = scalar_forward(params0["constant"])
    jax.block_until_ready(out0)
    assert jnp.allclose(out0, jnp.float32(0.0))

    print("KERNEL_OK")
</pallas_src>

<mosaic_0001>
module attributes {stable_mosaic.version = 11 : i64} {
  func.func @_scalar_kernel(%arg0: memref<1x1xf32, #tpu.memory_space<vmem>>, %arg1: memref<1x1xf32, #tpu.memory_space<vmem>>) attributes {dimension_semantics = [], scalar_prefetch = 0 : i64, scratch_operands = 0 : i64, tpu.core_type = #tpu.core_type<tc>} {
    %c0 = arith.constant 0 : index
    %c0_0 = arith.constant 0 : index
    %0 = vector.load %arg0[%c0, %c0_0] : memref<1x1xf32, #tpu.memory_space<vmem>>, vector<1x1xf32>
    %c0_1 = arith.constant 0 : index
    %c0_2 = arith.constant 0 : index
    %1 = vector.load %arg1[%c0_1, %c0_2] : memref<1x1xf32, #tpu.memory_space<vmem>>, vector<1x1xf32>
    tpu.vector_store %arg1[%c0_1, %c0_2], %0 {strides = array<i32>} : memref<1x1xf32, #tpu.memory_space<vmem>>, vector<1x1xf32>,
    return
  }
}

</mosaic_0001>

<llo_original>
// kernel: scalar_forward.1
$region0: #{scalar_forward.1}
  #allocation0 [shape = 'u32[]', space=smem, size = 0x4, offset = 0x4, fixed_abs, tag = 'smem constant byte address 0x4 - core index']
  #allocation1 [shape = 'u32[144,128]{1,0:T(1,128)}', space=vmem, size = 0x12000, scoped, tag = 'internal scratch']
  #allocation2 [shape = 'f32[1,1]{1,0:T(1,128)S(1)}', space=vmem, size = 0x200, scoped, tag = 'scoped memory for scalar_forward.1']
  %s0 = inlined_call_operand.<no memory space> [shape: f32[1,1], index: 0, kind: input, shape index: {}]
  %s1 = inlined_call_operand.hbm [shape: f32[1,1], index: 1, kind: output, shape index: {}]
  %s2 = sld [smem:[#allocation0]]
  $region14: #{scalar_forward.1} parent=0
    _
  %s4 = ssub.s32 1, %s2
  %s5 = scalar_select 0, %s4, %s2
  %v6 = vstv %s0
  %7 = vst [vmem:[#allocation2] sm:$0x1] %v6
  $region1: #{scalar_forward.1} parent=0
    #allocation3 [shape = 'u8[512]{0}', space=vmem, size = 0x400, scoped, tag = 'output window, operand 0, single buffered']
    #allocation4 [shape = 's32[1]{0}', space=sflag, size = 0x4, scoped, tag = 'scoped memory for scalar_forward.1']
    %8 = vsyncpa [#allocation4], 0
    // Predicated region
    $region2: #{scalar_forward.1} parent=1 // pred_check
      _
    $region3: #{scalar_forward.1} parent=1 // pred_check_branch
      %10 = sbr.rel (0) target = $region5
    $region4: #{scalar_forward.1} parent=1 // pred_region
      _
    $region5: #{scalar_forward.1} parent=1 // pred_fallthru
      _
    %v11 = vld [vmem:[#allocation2] sm:$0x1]
    %vm12 = vcmask 0
    %13 = vst.msk [vmem:[#allocation3] sm:$0x1] %vm12, %v11
    // Predicated region
    $region6: #{scalar_forward.1} parent=1 // pred_check
      _
    $region7: #{scalar_forward.1} parent=1 // pred_check_branch
      %15 = sbr.rel (0) target = $region9
    $region8: #{scalar_forward.1} parent=1 // pred_region
      %s17 = ssub.s32 16, 16
      %18 = vsyncadd [#allocation4], %s17
      %s20 = sshll.u32 [#allocation3], 4
      %s21 = int_to_ptr.vmem [resolvable:$true] %s20
      %23 = dma.vmem_to_hbm [thread:$0]  %s21, 16, %s1, [#allocation4]
    $region9: #{scalar_forward.1} parent=1 // pred_fallthru
      _
    // Predicated region
    $region10: #{scalar_forward.1} parent=1 // pred_check
      _
    $region11: #{scalar_forward.1} parent=1 // pred_check_branch
      %25 = sbr.rel (0) target = $region13
    $region12: #{scalar_forward.1} parent=1 // pred_region
      %26 = dma.done [#allocation4], 16
    $region13: #{scalar_forward.1} parent=1 // pred_fallthru
      _
    %27 = vsyncpa [#allocation4], 1

</llo_original>
